<compile_context>
chip_gen: v6e
topology: v6e:2x2x1
jax: 0.10.0
libtpu: 0.0.40
codegen_flags: <defaults>
</compile_context>

<pallas_src>
import functools

import jax
import jax.numpy as jnp
from jax.experimental import pallas as pl
from jax.experimental.pallas import tpu as pltpu

LANE = 128
SUB = 8


def _round_up(x, m):
    return ((x + m - 1) // m) * m


# ----------------------------------------------------------------------------
# Parameter init (matches PyTorch: xavier_normal_ weights, zero biases,
# weight layout (out, in)).
# ----------------------------------------------------------------------------
def cnet_init_params(key, d, depth, n_nodes):
    dims = [d] + [n_nodes] * (depth - 1) + [1]
    params = []
    for i in range(depth):
        fan_in, fan_out = dims[i], dims[i + 1]
        key, sub = jax.random.split(key)
        std = (2.0 / (fan_in + fan_out)) ** 0.5
        w = std * jax.random.normal(sub, (fan_out, fan_in), dtype=jnp.float32)
        b = jnp.zeros((fan_out,), dtype=jnp.float32)
        params.append((w, b))
    return params


# ----------------------------------------------------------------------------
# One-time parameter packing (hoisted out of the per-call forward):
#  - first layer: (d, H_pad) f32 weight + (1, H_pad) f32 bias (f32 matmul).
#  - hidden layers: (H_pad, H_pad) bf16 weights + (1, H_pad) f32 biases.
#  - final 1-unit layer: (1, H_pad) f32 row + (1, 1) f32 bias, consumed as a
#    VPU multiply + lane reduction (no 128-lane padded output).
# Zero padding is exact in bf16; the input is never padded/copied.
# ----------------------------------------------------------------------------
def cnet_pack_params(params, d):
    n_layers = len(params)
    packed = []
    in_pad = d
    for li, (w, b) in enumerate(params):
        out_dim, in_dim = w.shape
        if li == n_layers - 1:
            assert out_dim == 1, "cnet final layer must have 1 output unit"
            w_row = jnp.zeros((1, in_pad), jnp.float32).at[0, :in_dim].set(w[0])
            b_p = jnp.asarray(b, jnp.float32).reshape(1, 1)
            packed.append((w_row, b_p))
        else:
            out_pad = _round_up(out_dim, LANE)
            w_t = jnp.zeros((in_pad, out_pad), jnp.float32)
            w_t = w_t.at[:in_dim, :out_dim].set(w.T)
            b_p = jnp.zeros((1, out_pad), jnp.float32).at[0, :out_dim].set(b)
            if li == 0:
                packed.append((w_t, b_p))                      # f32 first layer
            else:
                packed.append((w_t.astype(jnp.bfloat16), b_p))  # bf16 hidden
            in_pad = out_pad
    return packed


# ----------------------------------------------------------------------------
# Kernel: full MLP forward for one batch tile. refs = [x, (W, b) * L, out].
# ----------------------------------------------------------------------------
def _make_mlp_kernel(n_layers):
    def kernel(*refs):
        x_ref = refs[0]
        o_ref = refs[-1]

        def sigmoid(z):
            # sigmoid(z) == 0.5*tanh(0.5*z) + 0.5  -> single EUP op, in f32.
            return 0.5 * jnp.tanh(0.5 * z) + 0.5

        # Layer 1: f32 matmul (K = d is tiny; keeps parity with f32 reference).
        h = x_ref[...]
        z = jnp.dot(h, refs[1][...], preferred_element_type=jnp.float32)
        h = sigmoid(z + refs[2][...])

        # Hidden layers: bf16 x bf16 on the MXU, f32 accumulation.
        for i in range(1, n_layers - 1):
            w = refs[1 + 2 * i][...]          # bf16 (in_pad, out_pad)
            b = refs[2 + 2 * i][...]          # f32  (1, out_pad)
            z = jnp.dot(h.astype(jnp.bfloat16), w,
                        preferred_element_type=jnp.float32)
            h = sigmoid(z + b)

        # Final 1-unit layer: VPU multiply + XLU lane reduction -> (tb, 1).
        w_last = refs[1 + 2 * (n_layers - 1)][...]   # f32 (1, in_pad)
        b_last = refs[2 + 2 * (n_layers - 1)][...]   # f32 (1, 1)
        z = jnp.sum(h * w_last, axis=-1, keepdims=True) + b_last
        o_ref[...] = sigmoid(z)                       # (tb, 1) f32
    return kernel


# ----------------------------------------------------------------------------
# Forward pass: batch-tiled grid, resident weights, megacore-parallel.
# ----------------------------------------------------------------------------
@functools.partial(jax.jit, static_argnames=("tile_b", "interpret"))
def cnet_forward(u, packed_params, tile_b=1024, interpret=False):
    batch, d = u.shape
    n_layers = len(packed_params)

    # Big tiles amortize the ~0.35 us per-grid-step overhead, but cap the
    # tile so large batches still yield >= ~4 grid steps: with
    # dimension_semantics=("parallel",) both v7x TensorCores get work.
    tile_b = max(SUB, (tile_b // SUB) * SUB)
    tb = min(tile_b, _round_up((batch + 3) // 4, SUB))
    grid = (pl.cdiv(batch, tb),)

    kernel_args = [u]
    in_specs = [pl.BlockSpec((tb, d), lambda i: (i, 0))]          # streamed
    for (w, b) in packed_params:
        kernel_args.append(w)
        kernel_args.append(b)
        # Constant index_map -> weights/biases stay VMEM-resident (DMA'd once).
        in_specs.append(pl.BlockSpec(w.shape, lambda i: (0, 0)))
        in_specs.append(pl.BlockSpec(b.shape, lambda i: (0, 0)))
    out_spec = pl.BlockSpec((tb, 1), lambda i: (i, 0))            # lane 0 only

    return pl.pallas_call(
        _make_mlp_kernel(n_layers),
        out_shape=jax.ShapeDtypeStruct((batch, 1), jnp.float32),
        grid=grid,
        in_specs=in_specs,
        out_specs=out_spec,
        compiler_params=pltpu.CompilerParams(
            dimension_semantics=("parallel",)),
        interpret=interpret,
    )(*kernel_args)


# ----------------------------------------------------------------------------
# Pure-JAX reference matching PyTorch semantics exactly (f32 throughout).
# ----------------------------------------------------------------------------
def cnet_forward_ref(u, params):
    h = u
    for (w, b) in params:
        h = jax.nn.sigmoid(h @ w.T + b)
    return h


if __name__ == "__main__":
    key = jax.random.PRNGKey(0)
    k_x, k_p, k_x2 = jax.random.split(key, 3)

    batch, d, depth, n_nodes = 8, 16, 3, 32
    x = jax.random.normal(k_x, (batch, d), dtype=jnp.float32)
    params = cnet_init_params(k_p, d, depth, n_nodes)
    packed = cnet_pack_params(params, d)     # one-time prep, outside hot path

    # Small single-tile case.
    out = jax.block_until_ready(cnet_forward(x, packed))
    ref = cnet_forward_ref(x, params)
    assert out.shape == (batch, 1), out.shape
    assert jnp.allclose(out, ref, atol=2e-2, rtol=0), "mismatch vs reference"

    # Multi-tile case with a ragged last batch tile (exercises grid + masking
    # and the >=4-step cap for v7x megacore sharding).
    batch2 = 200
    x2 = jax.random.normal(k_x2, (batch2, d), dtype=jnp.float32)
    out2 = jax.block_until_ready(cnet_forward(x2, packed, tile_b=64))
    ref2 = cnet_forward_ref(x2, params)
    assert out2.shape == (batch2, 1), out2.shape
    assert jnp.allclose(out2, ref2, atol=2e-2, rtol=0), "mismatch vs reference (tiled)"

    print("KERNEL_OK")
</pallas_src>

<mosaic_0001>
module attributes {stable_mosaic.version = 11 : i64} {
  func.func @kernel(%arg0: i32, %arg1: memref<8x16xf32, #tpu.memory_space<vmem>>, %arg2: memref<16x128xf32, #tpu.memory_space<vmem>>, %arg3: memref<1x128xf32, #tpu.memory_space<vmem>>, %arg4: memref<128x128xbf16, #tpu.memory_space<vmem>>, %arg5: memref<1x128xf32, #tpu.memory_space<vmem>>, %arg6: memref<1x128xf32, #tpu.memory_space<vmem>>, %arg7: memref<1x1xf32, #tpu.memory_space<vmem>>, %arg8: memref<8x1xf32, #tpu.memory_space<vmem>>) attributes {dimension_semantics = [#tpu.dimension_semantics<parallel>], iteration_bounds = array<i64: 1>, scalar_prefetch = 0 : i64, scratch_operands = 0 : i64, tpu.core_type = #tpu.core_type<tc>, window_params = [{transform_indices = @transform_0, window_bounds = array<i64: 8, 16>}, {pipeline_mode = #tpu.pipeline_mode<synchronous>, transform_indices = @transform_1, window_bounds = array<i64: 16, 128>}, {pipeline_mode = #tpu.pipeline_mode<synchronous>, transform_indices = @transform_2, window_bounds = array<i64: 1, 128>}, {pipeline_mode = #tpu.pipeline_mode<synchronous>, transform_indices = @transform_3, window_bounds = array<i64: 128, 128>}, {pipeline_mode = #tpu.pipeline_mode<synchronous>, transform_indices = @transform_4, window_bounds = array<i64: 1, 128>}, {pipeline_mode = #tpu.pipeline_mode<synchronous>, transform_indices = @transform_5, window_bounds = array<i64: 1, 128>}, {pipeline_mode = #tpu.pipeline_mode<synchronous>, transform_indices = @transform_6, window_bounds = array<i64: 1, 1>}, {transform_indices = @transform_7, window_bounds = array<i64: 8, 1>}]} {
    %c0 = arith.constant 0 : index
    %c0_0 = arith.constant 0 : index
    %0 = vector.load %arg1[%c0, %c0_0] : memref<8x16xf32, #tpu.memory_space<vmem>>, vector<8x16xf32>
    %c0_1 = arith.constant 0 : index
    %c0_2 = arith.constant 0 : index
    %1 = vector.load %arg2[%c0_1, %c0_2] : memref<16x128xf32, #tpu.memory_space<vmem>>, vector<16x128xf32>
    %cst = arith.constant dense<0.000000e+00> : vector<8x128xf32>
    %2 = tpu.matmul %0, %1, %cst {dimension_numbers = #tpu.dot_dimension_numbers<[1], [0], [0], [1], [0, 0, 1, 1], [], []>} : vector<8x16xf32>, vector<16x128xf32>, vector<8x128xf32> -> vector<8x128xf32>
    %c0_3 = arith.constant 0 : index
    %c0_4 = arith.constant 0 : index
    %3 = vector.load %arg3[%c0_3, %c0_4] : memref<1x128xf32, #tpu.memory_space<vmem>>, vector<1x128xf32>
    %4 = vector.broadcast %3 : vector<1x128xf32> to vector<8x128xf32>
    %5 = arith.addf %2, %4 : vector<8x128xf32>
    %cst_5 = arith.constant 5.000000e-01 : f32
    %6 = vector.broadcast %cst_5 : f32 to vector<8x128xf32>
    %7 = arith.mulf %6, %5 : vector<8x128xf32>
    %8 = math.tanh %7 : vector<8x128xf32>
    %cst_6 = arith.constant 5.000000e-01 : f32
    %9 = vector.broadcast %cst_6 : f32 to vector<8x128xf32>
    %10 = arith.mulf %9, %8 : vector<8x128xf32>
    %cst_7 = arith.constant 5.000000e-01 : f32
    %11 = vector.broadcast %cst_7 : f32 to vector<8x128xf32>
    %12 = arith.addf %10, %11 : vector<8x128xf32>
    %c0_8 = arith.constant 0 : index
    %c0_9 = arith.constant 0 : index
    %13 = vector.load %arg4[%c0_8, %c0_9] : memref<128x128xbf16, #tpu.memory_space<vmem>>, vector<128x128xbf16>
    %c0_10 = arith.constant 0 : index
    %c0_11 = arith.constant 0 : index
    %14 = vector.load %arg5[%c0_10, %c0_11] : memref<1x128xf32, #tpu.memory_space<vmem>>, vector<1x128xf32>
    %15 = arith.truncf %12 : vector<8x128xf32> to vector<8x128xbf16>
    %cst_12 = arith.constant dense<0.000000e+00> : vector<8x128xf32>
    %16 = tpu.matmul %15, %13, %cst_12 {dimension_numbers = #tpu.dot_dimension_numbers<[1], [0], [0], [1], [0, 0, 1, 1], [], []>} : vector<8x128xbf16>, vector<128x128xbf16>, vector<8x128xf32> -> vector<8x128xf32>
    %17 = vector.broadcast %14 : vector<1x128xf32> to vector<8x128xf32>
    %18 = arith.addf %16, %17 : vector<8x128xf32>
    %cst_13 = arith.constant 5.000000e-01 : f32
    %19 = vector.broadcast %cst_13 : f32 to vector<8x128xf32>
    %20 = arith.mulf %19, %18 : vector<8x128xf32>
    %21 = math.tanh %20 : vector<8x128xf32>
    %cst_14 = arith.constant 5.000000e-01 : f32
    %22 = vector.broadcast %cst_14 : f32 to vector<8x128xf32>
    %23 = arith.mulf %22, %21 : vector<8x128xf32>
    %cst_15 = arith.constant 5.000000e-01 : f32
    %24 = vector.broadcast %cst_15 : f32 to vector<8x128xf32>
    %25 = arith.addf %23, %24 : vector<8x128xf32>
    %c0_16 = arith.constant 0 : index
    %c0_17 = arith.constant 0 : index
    %26 = vector.load %arg6[%c0_16, %c0_17] : memref<1x128xf32, #tpu.memory_space<vmem>>, vector<1x128xf32>
    %c0_18 = arith.constant 0 : index
    %c0_19 = arith.constant 0 : index
    %27 = vector.load %arg7[%c0_18, %c0_19] : memref<1x1xf32, #tpu.memory_space<vmem>>, vector<1x1xf32>
    %28 = vector.broadcast %26 : vector<1x128xf32> to vector<8x128xf32>
    %29 = arith.mulf %25, %28 : vector<8x128xf32>
    %cst_20 = arith.constant dense<0.000000e+00> : vector<8xf32>
    %30 = vector.multi_reduction <add>, %29, %cst_20 [1] : vector<8x128xf32> to vector<8xf32>
    %31 = vector.shape_cast %30 : vector<8xf32> to vector<8x1xf32>
    %32 = vector.broadcast %27 : vector<1x1xf32> to vector<8x1xf32>
    %33 = arith.addf %31, %32 : vector<8x1xf32>
    %cst_21 = arith.constant 5.000000e-01 : f32
    %34 = vector.broadcast %cst_21 : f32 to vector<8x1xf32>
    %35 = arith.mulf %34, %33 : vector<8x1xf32>
    %36 = math.tanh %35 : vector<8x1xf32>
    %cst_22 = arith.constant 5.000000e-01 : f32
    %37 = vector.broadcast %cst_22 : f32 to vector<8x1xf32>
    %38 = arith.mulf %37, %36 : vector<8x1xf32>
    %cst_23 = arith.constant 5.000000e-01 : f32
    %39 = vector.broadcast %cst_23 : f32 to vector<8x1xf32>
    %40 = arith.addf %38, %39 : vector<8x1xf32>
    %c0_24 = arith.constant 0 : index
    %c0_25 = arith.constant 0 : index
    %41 = vector.load %arg8[%c0_24, %c0_25] : memref<8x1xf32, #tpu.memory_space<vmem>>, vector<8x1xf32>
    tpu.vector_store %arg8[%c0_24, %c0_25], %40 {strides = array<i32>} : memref<8x1xf32, #tpu.memory_space<vmem>>, vector<8x1xf32>,
    return
  }
  func.func @transform_0(%arg0: i32) -> (i32, i32) {
    %c0_i32 = arith.constant 0 : i32
    %c0_i32_0 = arith.constant 0 : i32
    return %arg0, %c0_i32 : i32, i32
  }
  func.func @transform_1(%arg0: i32) -> (i32, i32) {
    %c0_i32 = arith.constant 0 : i32
    %c0_i32_0 = arith.constant 0 : i32
    %c0_i32_1 = arith.constant 0 : i32
    return %c0_i32, %c0_i32_0 : i32, i32
  }
  func.func @transform_2(%arg0: i32) -> (i32, i32) {
    %c0_i32 = arith.constant 0 : i32
    %c0_i32_0 = arith.constant 0 : i32
    %c0_i32_1 = arith.constant 0 : i32
    return %c0_i32, %c0_i32_0 : i32, i32
  }
  func.func @transform_3(%arg0: i32) -> (i32, i32) {
    %c0_i32 = arith.constant 0 : i32
    %c0_i32_0 = arith.constant 0 : i32
    %c0_i32_1 = arith.constant 0 : i32
    return %c0_i32, %c0_i32_0 : i32, i32
  }
  func.func @transform_4(%arg0: i32) -> (i32, i32) {
    %c0_i32 = arith.constant 0 : i32
    %c0_i32_0 = arith.constant 0 : i32
    %c0_i32_1 = arith.constant 0 : i32
    return %c0_i32, %c0_i32_0 : i32, i32
  }
  func.func @transform_5(%arg0: i32) -> (i32, i32) {
    %c0_i32 = arith.constant 0 : i32
    %c0_i32_0 = arith.constant 0 : i32
    %c0_i32_1 = arith.constant 0 : i32
    return %c0_i32, %c0_i32_0 : i32, i32
  }
  func.func @transform_6(%arg0: i32) -> (i32, i32) {
    %c0_i32 = arith.constant 0 : i32
    %c0_i32_0 = arith.constant 0 : i32
    %c0_i32_1 = arith.constant 0 : i32
    return %c0_i32, %c0_i32_0 : i32, i32
  }
  func.func @transform_7(%arg0: i32) -> (i32, i32) {
    %c0_i32 = arith.constant 0 : i32
    %c0_i32_0 = arith.constant 0 : i32
    return %arg0, %c0_i32 : i32, i32
  }
}

</mosaic_0001>

<llo_original>
// kernel: cnet_forward.1
$region0: #{cnet_forward.1}
  #allocation0 [shape = 'u32[]', space=smem, size = 0x4, offset = 0x4, fixed_abs, tag = 'smem constant byte address 0x4 - core index']
  #allocation1 [shape = 'u32[144,128]{1,0:T(1,128)}', space=vmem, size = 0x12000, scoped, tag = 'internal scratch']
  #allocation2 [shape = 'f32[1,1]{1,0:T(1,128)S(1)}', space=vmem, size = 0x200, scoped, tag = 'scoped memory for cnet_forward.1']
  %s0 = inlined_call_operand.hbm [shape: f32[8,16], index: 0, kind: input, shape index: {}]
  %s1 = inlined_call_operand.hbm [shape: f32[16,128], index: 1, kind: input, shape index: {}]
  %s2 = inlined_call_operand.vmem [shape: f32[1,128], index: 2, kind: input, shape index: {}]
  %s3 = inlined_call_operand.hbm [shape: bf16[128,128], index: 3, kind: input, shape index: {}]
  %s4 = inlined_call_operand.vmem [shape: f32[1,128], index: 4, kind: input, shape index: {}]
  %s5 = inlined_call_operand.vmem [shape: f32[1,128], index: 5, kind: input, shape index: {}]
  %s6 = inlined_call_operand.<no memory space> [shape: f32[1,1], index: 6, kind: input, shape index: {}]
  %s7 = inlined_call_operand.vmem [shape: f32[8,1], index: 7, kind: output, shape index: {}]
  %s8 = sld [smem:[#allocation0]]
  $region50: #{cnet_forward.1} parent=0
    _
  %s10 = ssub.s32 1, %s8
  %s11 = scalar_select 0, %s10, %s8
  %v12 = vstv %s6
  %13 = vst [vmem:[#allocation2] sm:$0x1] %v12
  $region1: #{cnet_forward.1} parent=0
    #allocation3 [shape = 'u8[4096]{0}', space=vmem, size = 0x1000, scoped, tag = 'input window, operand 0, single buffered']
    #allocation4 [shape = 's32[1]{0}', space=sflag, size = 0x4, scoped, tag = 'scoped memory for cnet_forward.1']
    #allocation5 [shape = 'u8[8192]{0}', space=vmem, size = 0x2000, scoped, tag = 'input window, operand 1, single buffered']
    #allocation6 [shape = 's32[1]{0}', space=sflag, size = 0x4, scoped, tag = 'scoped memory for cnet_forward.1']
    #allocation7 [shape = 'u8[32768]{0}', space=vmem, size = 0x8000, scoped, tag = 'input window, operand 3, single buffered']
    %14 = vsyncpa [#allocation4], 0
    %15 = vsyncpa [#allocation6], 0
    // Predicated region
    $region2: #{cnet_forward.1} parent=1 // pred_check
      _
    $region3: #{cnet_forward.1} parent=1 // pred_check_branch
      %17 = sbr.rel (0) target = $region5
    $region4: #{cnet_forward.1} parent=1 // pred_region
      %s19 = ssub.s32 128, 128
      %20 = vsyncadd [#allocation4], %s19
      %s22 = sshll.u32 [#allocation3], 4
      %s23 = int_to_ptr.vmem [resolvable:$true] %s22
      %25 = dma.hbm_to_vmem [thread:$0]  %s0, 128, %s23, [#allocation4]
    $region5: #{cnet_forward.1} parent=1 // pred_fallthru
      _
    // Predicated region
    $region6: #{cnet_forward.1} parent=1 // pred_check
      _
    $region7: #{cnet_forward.1} parent=1 // pred_check_branch
      %27 = sbr.rel (0) target = $region9
    $region8: #{cnet_forward.1} parent=1 // pred_region
      %s29 = ssub.s32 256, 256
      %30 = vsyncadd [#allocation6], %s29
      %s31 = sshll.u32 [#allocation5], 4
      %s32 = int_to_ptr.vmem [resolvable:$true] %s31
      %37 = dma.hbm_to_vmem [thread:$0]  %s1, 256, %s32, [#allocation6], 128, 128, 8
    $region9: #{cnet_forward.1} parent=1 // pred_fallthru
      _
    // Predicated region
    $region10: #{cnet_forward.1} parent=1 // pred_check
      _
    $region11: #{cnet_forward.1} parent=1 // pred_check_branch
      %39 = sbr.rel (0) target = $region13
    $region12: #{cnet_forward.1} parent=1 // pred_region
      _
    $region13: #{cnet_forward.1} parent=1 // pred_fallthru
      _
    // Predicated region
    $region14: #{cnet_forward.1} parent=1 // pred_check
      _
    $region15: #{cnet_forward.1} parent=1 // pred_check_branch
      %41 = sbr.rel (0) target = $region17
    $region16: #{cnet_forward.1} parent=1 // pred_region
      %s43 = ssub.s32 1024, 1024
      %44 = vsyncadd [#allocation6], %s43
      %s45 = sshll.u32 [#allocation7], 4
      %s46 = int_to_ptr.vmem [resolvable:$true] %s45
      %51 = dma.hbm_to_vmem [thread:$0]  %s3, 1024, %s46, [#allocation6], 64, 64, 4
    $region17: #{cnet_forward.1} parent=1 // pred_fallthru
      _
    // Predicated region
    $region18: #{cnet_forward.1} parent=1 // pred_check
      _
    $region19: #{cnet_forward.1} parent=1 // pred_check_branch
      %53 = sbr.rel (0) target = $region21
    $region20: #{cnet_forward.1} parent=1 // pred_region
      _
    $region21: #{cnet_forward.1} parent=1 // pred_fallthru
      _
    // Predicated region
    $region22: #{cnet_forward.1} parent=1 // pred_check
      _
    $region23: #{cnet_forward.1} parent=1 // pred_check_branch
      %55 = sbr.rel (0) target = $region25
    $region24: #{cnet_forward.1} parent=1 // pred_region
      _
    $region25: #{cnet_forward.1} parent=1 // pred_fallthru
      _
    // Predicated region
    $region26: #{cnet_forward.1} parent=1 // pred_check
      _
    $region27: #{cnet_forward.1} parent=1 // pred_check_branch
      %57 = sbr.rel (0) target = $region29
    $region28: #{cnet_forward.1} parent=1 // pred_region
      _
    $region29: #{cnet_forward.1} parent=1 // pred_fallthru
      _
    // Predicated region
    $region30: #{cnet_forward.1} parent=1 // pred_check
      _
    $region31: #{cnet_forward.1} parent=1 // pred_check_branch
      %59 = sbr.rel (0) target = $region33
    $region32: #{cnet_forward.1} parent=1 // pred_region
      %60 = dma.done [#allocation4], 128
    $region33: #{cnet_forward.1} parent=1 // pred_fallthru
      _
    // Predicated region
    $region34: #{cnet_forward.1} parent=1 // pred_check
      _
    $region35: #{cnet_forward.1} parent=1 // pred_check_branch
      %62 = sbr.rel (0) target = $region37
    $region36: #{cnet_forward.1} parent=1 // pred_region
      %63 = dma.done [#allocation6], 256
    $region37: #{cnet_forward.1} parent=1 // pred_fallthru
      _
    // Predicated region
    $region38: #{cnet_forward.1} parent=1 // pred_check
      _
    $region39: #{cnet_forward.1} parent=1 // pred_check_branch
      %65 = sbr.rel (0) target = $region41
    $region40: #{cnet_forward.1} parent=1 // pred_region
      %66 = dma.done [#allocation6], 1024
    $region41: #{cnet_forward.1} parent=1 // pred_fallthru
      _
    %v68 = vld [vmem:[#allocation3] sm:$0xff]
    %v69 = vld [vmem:[#allocation5] sm:$0xff]
    %v70 = vld [vmem:[#allocation5 + $0x8] sm:$0xff]
    %v71 = vld [vmem:[%s2] sm:$0x1]
    %v73 = vlaneseq
    %v74 = vshrl.u32 %v73, 7
    %v75 = vsub.s32 0, %v74
    %v76 = vrot.slane %v71, %v75
    %vm78 = vcmask 130048
    %v80 = vsel %vm78, %v68, 0
    %82 = vmatprep.subr.mxu0 0.0
    %83 = vmatpush1.msra.mxu0 0.0
    %84 = vmatprep.subr.mxu0 0.0
    %85 = vmatpush1.msra.mxu0 0.0
    %86 = vmatprep.subr.mxu0 0.0
    %87 = vmatpush1.msra.mxu0 0.0
    %88 = vmatprep.subr.mxu0 0.0
    %89 = vmatpush1.msra.mxu0 0.0
    %90 = vmatprep.subr.mxu0 0.0
    %91 = vmatpush1.msra.mxu0 0.0
    %92 = vmatprep.subr.mxu0 0.0
    %93 = vmatpush1.msra.mxu0 0.0
    %94 = vmatprep.subr.mxu0 0.0
    %95 = vmatpush1.msra.mxu0 0.0
    %96 = vmatprep.subr.mxu0 0.0
    %97 = vmatpush1.msra.mxu0 0.0
    %98 = vmatprep.subr.mxu0 0.0
    %99 = vmatpush1.msra.mxu0 0.0
    %100 = vmatprep.subr.mxu0 0.0
    %101 = vmatpush1.msra.mxu0 0.0
    %102 = vmatprep.subr.mxu0 0.0
    %103 = vmatpush1.msra.mxu0 0.0
    %104 = vmatprep.subr.mxu0 0.0
    %105 = vmatpush1.msra.mxu0 0.0
    %106 = vmatprep.subr.mxu0 0.0
    %107 = vmatpush1.msra.mxu0 0.0
    %108 = vmatprep.subr.mxu0 0.0
    %109 = vmatpush1.msra.mxu0 0.0
    %110 = vmatprep.subr.mxu0 0.0
    %111 = vmatpush1.msra.mxu0 %v70
    %112 = vmatprep.subr.mxu0 0.0
    %113 = vmatpush1.msra.mxu0 %v69
    %114 = vmatprep.subr.mxu0 0.0
    %115 = vmatpush2.msra.mxu0 0.0
    %116 = vmatprep.subr.mxu0 0.0
    %117 = vmatpush2.msra.mxu0 0.0
    %118 = vmatprep.subr.mxu0 0.0
    %119 = vmatpush2.msra.mxu0 0.0
    %120 = vmatprep.subr.mxu0 0.0
    %121 = vmatpush2.msra.mxu0 0.0
    %122 = vmatprep.subr.mxu0 0.0
    %123 = vmatpush2.msra.mxu0 0.0
    %124 = vmatprep.subr.mxu0 0.0
    %125 = vmatpush2.msra.mxu0 0.0
    %126 = vmatprep.subr.mxu0 0.0
    %127 = vmatpush2.msra.mxu0 0.0
    %128 = vmatprep.subr.mxu0 0.0
    %129 = vmatpush2.msra.mxu0 0.0
    %130 = vmatprep.subr.mxu0 0.0
    %131 = vmatpush2.msra.mxu0 0.0
    %132 = vmatprep.subr.mxu0 0.0
    %133 = vmatpush2.msra.mxu0 0.0
    %134 = vmatprep.subr.mxu0 0.0
    %135 = vmatpush2.msra.mxu0 0.0
    %136 = vmatprep.subr.mxu0 0.0
    %137 = vmatpush2.msra.mxu0 0.0
    %138 = vmatprep.subr.mxu0 0.0
    %139 = vmatpush2.msra.mxu0 0.0
    %140 = vmatprep.subr.mxu0 0.0
    %141 = vmatpush2.msra.mxu0 0.0
    %142 = vmatprep.subr.mxu0 0.0
    %143 = vmatpush2.msra.mxu0 0.0
    %144 = vmatprep.subr.mxu0 0.0
    %145 = vmatpush2.msra.mxu0 0.0
    %146 = vmatprep.mubr.f32.mxu0 0.0
    %147 = vmatmul.mubr.f32.gmra.mxu0 %v80
    %v148 = vpop.f32.mrf.mxu0
    %v149 = vadd.f32 %v76, %v148
    %v150 = vpop.f32.mrf.mxu0
    %151 = vdwg.mxu0
    %v152 = vmul.f32 %v149, 0.5
    %v153 = vtanh.pop %v152
    %v154 = vmul.f32 %v153, 0.5
    %v155 = vadd.f32 %v154, 0.5
    %v156 = vld [vmem:[#allocation7] sm:$0xf]
    %v157 = vld [vmem:[#allocation7 + $0x4] sm:$0xf]
    %v158 = vld [vmem:[#allocation7 + $0x8] sm:$0xf]
    %v159 = vld [vmem:[#allocation7 + $0xc] sm:$0xf]
    %v160 = vld [vmem:[#allocation7 + $0x10] sm:$0xf]
    %v161 = vld [vmem:[#allocation7 + $0x14] sm:$0xf]
    %v162 = vld [vmem:[#allocation7 + $0x18] sm:$0xf]
    %v163 = vld [vmem:[#allocation7 + $0x1c] sm:$0xf]
    %v164 = vld [vmem:[#allocation7 + $0x20] sm:$0xf]
    %v165 = vld [vmem:[#allocation7 + $0x24] sm:$0xf]
    %v166 = vld [vmem:[#allocation7 + $0x28] sm:$0xf]
    %v167 = vld [vmem:[#allocation7 + $0x2c] sm:$0xf]
    %v168 = vld [vmem:[#allocation7 + $0x30] sm:$0xf]
    %v169 = vld [vmem:[#allocation7 + $0x34] sm:$0xf]
    %v170 = vld [vmem:[#allocation7 + $0x38] sm:$0xf]
    %v171 = vld [vmem:[#allocation7 + $0x3c] sm:$0xf]
    %v172 = vld [vmem:[%s4] sm:$0x1]
    %v173 = vpack.c.bf16 %v155, %v155
    %v175 = vlaneseq
    %v176 = vshrl.u32 %v175, 7
    %v177 = vsub.s32 0, %v176
    %v178 = vrot.slane %v172, %v177
    %v196 = vunpack.c.l.b16 %v156
    %v197 = vunpack.c.l.b16 %v157
    %v198 = vunpack.c.l.b16 %v158
    %v199 = vunpack.c.l.b16 %v159
    %v200 = vunpack.c.l.b16 %v160
    %v201 = vunpack.c.l.b16 %v161
    %v202 = vunpack.c.l.b16 %v162
    %v203 = vunpack.c.l.b16 %v163
    %v204 = vunpack.c.l.b16 %v164
    %v205 = vunpack.c.l.b16 %v165
    %v206 = vunpack.c.l.b16 %v166
    %v207 = vunpack.c.l.b16 %v167
    %v208 = vunpack.c.l.b16 %v168
    %v209 = vunpack.c.l.b16 %v169
    %v210 = vunpack.c.l.b16 %v170
    %v211 = vunpack.c.l.b16 %v171
    %v212 = vpack.c.b16 %v197, %v196
    %v213 = vpack.c.b16 %v199, %v198
    %v214 = vpack.c.b16 %v201, %v200
    %v215 = vpack.c.b16 %v203, %v202
    %v216 = vpack.c.b16 %v205, %v204
    %v217 = vpack.c.b16 %v207, %v206
    %v218 = vpack.c.b16 %v209, %v208
    %v219 = vpack.c.b16 %v211, %v210
    %228 = vmatprep.subr.bf16.mxu0 0
    %229 = vmatpush1.bf16.msra.mxu0 %v219
    %230 = vmatprep.subr.bf16.mxu0 0
    %231 = vmatpush1.bf16.msra.mxu0 %v218
    %232 = vmatprep.subr.bf16.mxu0 0
    %233 = vmatpush1.bf16.msra.mxu0 %v217
    %234 = vmatprep.subr.bf16.mxu0 0
    %235 = vmatpush1.bf16.msra.mxu0 %v216
    %236 = vmatprep.subr.bf16.mxu0 0
    %237 = vmatpush1.bf16.msra.mxu0 %v215
    %238 = vmatprep.subr.bf16.mxu0 0
    %239 = vmatpush1.bf16.msra.mxu0 %v214
    %240 = vmatprep.subr.bf16.mxu0 0
    %241 = vmatpush1.bf16.msra.mxu0 %v213
    %242 = vmatprep.subr.bf16.mxu0 0
    %243 = vmatpush1.bf16.msra.mxu0 %v212
    %244 = vmatprep.subr.bf16.mxu0 0
    %245 = vmatpush2.bf16.msra.mxu0 0
    %246 = vmatprep.subr.bf16.mxu0 0
    %247 = vmatpush2.bf16.msra.mxu0 0
    %248 = vmatprep.subr.bf16.mxu0 0
    %249 = vmatpush2.bf16.msra.mxu0 0
    %250 = vmatprep.subr.bf16.mxu0 0
    %251 = vmatpush2.bf16.msra.mxu0 0
    %252 = vmatprep.subr.bf16.mxu0 0
    %253 = vmatpush2.bf16.msra.mxu0 0
    %254 = vmatprep.subr.bf16.mxu0 0
    %255 = vmatpush2.bf16.msra.mxu0 0
    %256 = vmatprep.subr.bf16.mxu0 0
    %257 = vmatpush2.bf16.msra.mxu0 0
    %258 = vmatprep.subr.bf16.mxu0 0
    %259 = vmatpush2.bf16.msra.mxu0 0
    %260 = vmatprep.mubr.bf16.mxu0 0
    %261 = vmatmul.mubr.bf16.gmra.mxu0 %v173
    %v262 = vpop.f32.mrf.mxu0
    %v263 = vadd.f32 %v178, %v262
    %v264 = vpop.f32.mrf.mxu0
    %v265 = vpop.f32.mrf.mxu0
    %v266 = vpop.f32.mrf.mxu0
    %267 = vdwg.mxu0
    %v268 = vmul.f32 %v263, 0.5
    %v269 = vtanh.pop %v268
    %v270 = vmul.f32 %v269, 0.5
    %v271 = vadd.f32 %v270, 0.5
    %v272 = vld [vmem:[%s5] sm:$0x1]
    %v273 = vld [vmem:[#allocation2] sm:$0x1]
    %v275 = vlaneseq
    %v276 = vshrl.u32 %v275, 7
    %v277 = vsub.s32 0, %v276
    %v278 = vrot.slane %v272, %v277
    %v280 = vmul.f32 %v271, %v278
    %281 = vadd.xlane.f32.xlu0 %v280
    %v282 = vpop.xlane.xlu0 %281
    %v284 = vlaneseq
    %v285 = vshrl.u32 %v284, 7
    %v286 = vsub.s32 0, %v285
    %v287 = vrot.slane %v273, %v286
    %v289 = vadd.f32 %v282, %v287
    %v290 = vmul.f32 %v289, 0.5
    %v291 = vtanh.pop %v290
    %v292 = vmul.f32 %v291, 0.5
    %v293 = vadd.f32 %v292, 0.5
    %vm294 = vcmask 7168
    %295 = vst.msk [vmem:[%s7] sm:$0xff] %vm294, %v293
    // Predicated region
    $region42: #{cnet_forward.1} parent=1 // pred_check
      _
    $region43: #{cnet_forward.1} parent=1 // pred_check_branch
      %297 = sbr.rel (0) target = $region45
    $region44: #{cnet_forward.1} parent=1 // pred_region
      _
    $region45: #{cnet_forward.1} parent=1 // pred_fallthru
      _
    // Predicated region
    $region46: #{cnet_forward.1} parent=1 // pred_check
      _
    $region47: #{cnet_forward.1} parent=1 // pred_check_branch
      %299 = sbr.rel (0) target = $region49
    $region48: #{cnet_forward.1} parent=1 // pred_region
      _
    $region49: #{cnet_forward.1} parent=1 // pred_fallthru
      _
    %300 = vsyncpa [#allocation4], 1
    %301 = vsyncpa [#allocation6], 1

</llo_original>
